<compile_context>
chip_gen: v7x
topology: tpu7x:2x2x1
jax: 0.10.0
libtpu: 0.0.40
codegen_flags: <defaults>
</compile_context>

<pallas_src>
import functools
import math

import jax
import jax.numpy as jnp
from jax import lax
from jax.experimental import pallas as pl
from jax.experimental.pallas import tpu as pltpu


_N_SCALARS = 8          # [m00, m01, m10, m11, loc0, loc1, hi_level, grey_level]
_MAX_TILE_H0 = 256      # sublane tile for the plane (large-canvas) path
_MAX_TILE_H1 = 1024     # lane tile (multiple of 128) for the plane path
_MAX_PACKED_PIXELS = 1 << 15   # packed path handles up to 32K pixels / stimulus


# --------------------------------------------------------------------------- #
# Plane path: one stimulus per grid step, tiled (tile_h0, tile_h1) output.     #
# --------------------------------------------------------------------------- #
def _bar_plane_kernel(tile_h0, tile_h1, s_ref, o_ref):
    # s_ref: SMEM f32[8*B] flat scalar table; o_ref: VMEM f32[tile_h0, tile_h1].
    b = pl.program_id(0)
    base = b * _N_SCALARS
    m00 = s_ref[base + 0]
    m01 = s_ref[base + 1]
    m10 = s_ref[base + 2]
    m11 = s_ref[base + 3]
    loc0 = s_ref[base + 4]
    loc1 = s_ref[base + 5]
    hi = s_ref[base + 6]      # amplitude + grey_level (hoisted on host)
    grey = s_ref[base + 7]

    # Global coordinates of this tile, centered on the bar location, factored
    # into a column vector (rows) and a row vector (cols); u/v are built with a
    # single broadcast add each instead of full-tile iotas + 4 full-tile muls.
    off0 = (pl.program_id(1) * tile_h0).astype(jnp.float32) - loc0
    off1 = (pl.program_id(2) * tile_h1).astype(jnp.float32) - loc1
    rows = lax.broadcasted_iota(jnp.float32, (tile_h0, 1), 0) + off0   # (tile_h0, 1)
    cols = lax.broadcasted_iota(jnp.float32, (1, tile_h1), 1) + off1   # (1, tile_h1)

    u = m00 * rows + m01 * cols            # broadcast -> (tile_h0, tile_h1)
    v = m10 * rows + m11 * cols
    inside = (jnp.abs(u) <= 1.0) & (jnp.abs(v) <= 1.0)
    o_ref[...] = jnp.where(inside, hi, grey)


def _bar_planes(table, canvas_size):
    """table: f32[B, 8]. Returns f32[B, H0, H1] bar planes (large-canvas path)."""
    bsz = int(table.shape[0])
    h0, h1 = int(canvas_size[0]), int(canvas_size[1])
    tile_h0 = h0 if h0 <= _MAX_TILE_H0 else _MAX_TILE_H0
    tile_h1 = h1 if h1 <= _MAX_TILE_H1 else _MAX_TILE_H1
    # v7x megacore: keep >=2 grid steps when a single stimulus would otherwise
    # collapse the grid to one step (leaving one TensorCore idle).
    if (bsz == 1 and pl.cdiv(h0, tile_h0) == 1 and pl.cdiv(h1, tile_h1) == 1
            and h0 >= 16 and (h0 // 2) % 8 == 0):
        tile_h0 = h0 // 2
    grid = (bsz, pl.cdiv(h0, tile_h0), pl.cdiv(h1, tile_h1))

    flat_table = table.reshape(-1)   # 1-D SMEM layout (avoid [B,8] lane padding)
    kernel = functools.partial(_bar_plane_kernel, tile_h0, tile_h1)
    return pl.pallas_call(
        kernel,
        out_shape=jax.ShapeDtypeStruct((bsz, h0, h1), jnp.float32),
        grid=grid,
        in_specs=[pl.BlockSpec(memory_space=pltpu.MemorySpace.SMEM)],
        out_specs=pl.BlockSpec((None, tile_h0, tile_h1),
                               lambda s, i, j: (s, i, j)),
        compiler_params=pltpu.CompilerParams(
            dimension_semantics=("parallel", "parallel", "parallel")),
    )(flat_table)


# --------------------------------------------------------------------------- #
# Packed path: lane-dense (TB, H0*H1) blocks, TB stimuli per grid step.        #
# --------------------------------------------------------------------------- #
def _bar_packed_kernel(tbl_ref, rc_ref, o_ref):
    # tbl_ref: VMEM f32[TB, 8]; rc_ref: VMEM f32[2, P] (row/col of each flat
    # pixel); o_ref: VMEM f32[TB, P].
    m00 = tbl_ref[:, 0:1]
    m01 = tbl_ref[:, 1:2]
    m10 = tbl_ref[:, 2:3]
    m11 = tbl_ref[:, 3:4]
    loc0 = tbl_ref[:, 4:5]
    loc1 = tbl_ref[:, 5:6]
    hi = tbl_ref[:, 6:7]
    grey = tbl_ref[:, 7:8]

    r = rc_ref[0:1, :]                     # (1, P) row coordinate
    c = rc_ref[1:2, :]                     # (1, P) col coordinate

    cu = m00 * loc0 + m01 * loc1           # per-stimulus constants, (TB, 1)
    cv = m10 * loc0 + m11 * loc1
    u = (m00 * r + m01 * c) - cu           # (TB, P)
    v = (m10 * r + m11 * c) - cv
    inside = (jnp.abs(u) <= 1.0) & (jnp.abs(v) <= 1.0)
    o_ref[...] = jnp.where(inside, hi, grey)


def _bar_packed(table, h0, h1):
    """table: f32[B, 8]. Returns f32[B, H0, H1] (narrow-canvas, lane-dense path)."""
    bsz = int(table.shape[0])
    p = h0 * h1
    b_pad = ((bsz + 7) // 8) * 8
    # TB: multiple of 8, <= 64, and block bytes (TB * P * 4) capped at ~2 MiB.
    tb = (max(8, min(64, (2 * 1024 * 1024) // (p * 4))) // 8) * 8
    tb = max(8, min(tb, b_pad))
    b_pad = ((b_pad + tb - 1) // tb) * tb
    if b_pad > bsz:
        pad = jnp.tile(table[-1:, :], (b_pad - bsz, 1))
        table = jnp.concatenate([table, pad], axis=0)

    # Flat-pixel -> (row, col) lookup, built on host (avoids in-kernel int div/mod).
    rows = jnp.repeat(jnp.arange(h0, dtype=jnp.float32), h1)
    cols = jnp.tile(jnp.arange(h1, dtype=jnp.float32), h0)
    rc = jnp.stack([rows, cols])           # (2, P)

    out = pl.pallas_call(
        _bar_packed_kernel,
        out_shape=jax.ShapeDtypeStruct((b_pad, p), jnp.float32),
        grid=(b_pad // tb,),
        in_specs=[pl.BlockSpec((tb, _N_SCALARS), lambda b: (b, 0)),
                  pl.BlockSpec((2, p), lambda b: (0, 0))],
        out_specs=pl.BlockSpec((tb, p), lambda b: (b, 0)),
        compiler_params=pltpu.CompilerParams(
            dimension_semantics=("parallel",)),
    )(table, rc)
    return out[:bsz].reshape(bsz, h0, h1)


def _bar_batch(table, canvas_size):
    h0, h1 = int(canvas_size[0]), int(canvas_size[1])
    if h1 < 128 and h0 * h1 <= _MAX_PACKED_PIXELS:
        return _bar_packed(table, h0, h1)
    return _bar_planes(table, canvas_size)


# --------------------------------------------------------------------------- #
# Host-side glue (2x2 algebra) and public wrappers.                            #
# --------------------------------------------------------------------------- #
def _bar_scalar_row(location, length, width, contrast, orientation, grey_level,
                    pixel_boundaries):
    """Builds the f32[8] scalar row for one stimulus."""
    location = jnp.asarray(location, jnp.float32).reshape((2,))
    length = jnp.asarray(length, jnp.float32).reshape(())
    width = jnp.asarray(width, jnp.float32).reshape(())
    contrast = jnp.asarray(contrast, jnp.float32).reshape(())
    orientation = jnp.asarray(orientation, jnp.float32).reshape(())
    grey_level = jnp.asarray(grey_level, jnp.float32).reshape(())

    # orientation = pi - orientation; M = R @ diag(width/2, length/2); use Minv.
    ori = jnp.float32(math.pi) - orientation
    c, s = jnp.cos(ori), jnp.sin(ori)
    w2 = width * 0.5
    l2 = length * 0.5
    a, b = c * w2, -s * l2
    d, e = s * w2, c * l2
    det = a * e - b * d          # no zero guard, same as the torch original
    m00 = e / det
    m01 = -b / det
    m10 = -d / det
    m11 = a / det

    amplitude = contrast * jnp.minimum(
        jnp.abs(jnp.float32(pixel_boundaries[0]) - grey_level),
        jnp.abs(jnp.float32(pixel_boundaries[1]) - grey_level))
    hi = amplitude + grey_level   # hoisted so the kernel does a pure select

    return jnp.stack([m00, m01, m10, m11,
                      location[0], location[1],
                      hi, grey_level]).astype(jnp.float32)


def _broadcast_scalar(v, n):
    """Accept a scalar, 0-d array, length-1 or length-n sequence/array."""
    if isinstance(v, (list, tuple)):
        vals = list(v)
    else:
        arr = jnp.asarray(v, jnp.float32)
        if arr.ndim == 0:
            return [arr] * n
        vals = [arr[i] for i in range(int(arr.shape[0]))]
    if len(vals) == 1 and n > 1:
        vals = vals * n
    if len(vals) != n:
        raise ValueError(f"expected 1 or {n} values, got {len(vals)}")
    return vals


def bar_forward(canvas_size, location, length, width, contrast, orientation,
                grey_level, pixel_boundaries=None):
    """Reproduces Bar.forward(). Returns f32 array of shape (1, 1, *canvas_size)."""
    if pixel_boundaries is None:
        pixel_boundaries = [-1.0, 1.0]
    row = _bar_scalar_row(location, length, width, contrast, orientation,
                          grey_level, pixel_boundaries)
    plane = _bar_batch(row[None, :], canvas_size)
    h0, h1 = int(canvas_size[0]), int(canvas_size[1])
    return plane.reshape((1, 1, h0, h1))


def bar_forward_batched(canvas_size, locations, lengths, widths, contrasts,
                        orientations, grey_levels, pixel_boundaries=None):
    """Batched variant: B stimuli in a single pallas_call. Returns (B, 1, H0, H1).

    Per-stimulus parameters may be given as sequences of length B or as scalars
    (broadcast to the batch).
    """
    if pixel_boundaries is None:
        pixel_boundaries = [-1.0, 1.0]
    locs = [jnp.asarray(l, jnp.float32).reshape((2,)) for l in locations]
    bsz = len(locs)
    lengths = _broadcast_scalar(lengths, bsz)
    widths = _broadcast_scalar(widths, bsz)
    contrasts = _broadcast_scalar(contrasts, bsz)
    orientations = _broadcast_scalar(orientations, bsz)
    grey_levels = _broadcast_scalar(grey_levels, bsz)

    rows = [_bar_scalar_row(locs[i], lengths[i], widths[i], contrasts[i],
                            orientations[i], grey_levels[i], pixel_boundaries)
            for i in range(bsz)]
    table = jnp.stack(rows).astype(jnp.float32)
    planes = _bar_batch(table, canvas_size)
    return planes[:, None, :, :]


def bar_reference(canvas_size, location, length, width, contrast, orientation,
                  grey_level, pixel_boundaries=None):
    """Pure-JAX mirror of the torch implementation, for verification."""
    if pixel_boundaries is None:
        pixel_boundaries = [-1.0, 1.0]
    location = jnp.asarray(location, jnp.float32)
    x, y = jnp.meshgrid(jnp.arange(canvas_size[0], dtype=jnp.float32) - location[0],
                        jnp.arange(canvas_size[1], dtype=jnp.float32) - location[1],
                        indexing="ij")
    coords = jnp.stack([x.ravel(), y.ravel()])
    ori = jnp.float32(math.pi) - jnp.asarray(orientation, jnp.float32)
    R = jnp.array([[jnp.cos(ori), -jnp.sin(ori)],
                   [jnp.sin(ori), jnp.cos(ori)]], jnp.float32)
    A = jnp.array([[width / 2.0, 0.0], [0.0, length / 2.0]], jnp.float32)
    Minv = jnp.linalg.inv(R @ A) @ coords
    Minv_norm = jnp.max(jnp.abs(Minv), axis=0).reshape(x.shape)
    bar_no_contrast = (Minv_norm <= 1.0).astype(jnp.float32)
    amplitude = contrast * min(abs(pixel_boundaries[0] - grey_level),
                               abs(pixel_boundaries[1] - grey_level))
    bar = amplitude * bar_no_contrast + grey_level
    return bar.reshape((1, 1, *canvas_size))


if __name__ == "__main__":
    key = jax.random.PRNGKey(0)
    grey_level = -0.2
    pixel_boundaries = [-1.0, 1.0]

    # --- Case 1: small production-like canvas, single stimulus (packed path) --
    k_loc, k_len, k_wid, k_con, k_ori, key = jax.random.split(key, 6)
    canvas_small = [16, 16]
    location = jax.random.uniform(k_loc, (2,), jnp.float32, 4.0, 12.0)
    length = float(jax.random.uniform(k_len, (), jnp.float32, 6.0, 12.0))
    width = float(jax.random.uniform(k_wid, (), jnp.float32, 1.5, 4.0))
    contrast = float(jax.random.uniform(k_con, (), jnp.float32, 0.5, 1.0))
    orientation = float(jax.random.uniform(k_ori, (), jnp.float32, 0.0, math.pi))

    out = bar_forward(canvas_small, location, length, width, contrast,
                      orientation, grey_level, pixel_boundaries)
    out = jax.block_until_ready(out)
    ref = bar_reference(canvas_small, location, length, width, contrast,
                        orientation, grey_level, pixel_boundaries)
    assert out.shape == (1, 1, canvas_small[0], canvas_small[1])
    assert out.dtype == jnp.float32
    assert bool(jnp.allclose(out, ref, atol=1e-5)), "mismatch (16x16 packed)"

    # --- Case 2: large canvas exercising the tiled plane path -----------------
    k_loc, k_len, k_wid, k_con, k_ori, key = jax.random.split(key, 6)
    canvas_big = [512, 1024]
    location_b = jax.random.uniform(k_loc, (2,), jnp.float32, 128.0, 384.0)
    length_b = float(jax.random.uniform(k_len, (), jnp.float32, 100.0, 300.0))
    width_b = float(jax.random.uniform(k_wid, (), jnp.float32, 10.0, 40.0))
    contrast_b = float(jax.random.uniform(k_con, (), jnp.float32, 0.5, 1.0))
    orientation_b = float(jax.random.uniform(k_ori, (), jnp.float32, 0.0, math.pi))

    out_b = bar_forward(canvas_big, location_b, length_b, width_b, contrast_b,
                        orientation_b, grey_level, pixel_boundaries)
    out_b = jax.block_until_ready(out_b)
    ref_b = bar_reference(canvas_big, location_b, length_b, width_b, contrast_b,
                          orientation_b, grey_level, pixel_boundaries)
    assert out_b.shape == (1, 1, canvas_big[0], canvas_big[1])
    assert bool(jnp.allclose(out_b, ref_b, atol=1e-5)), "mismatch (512x1024 tiled)"

    # --- Case 3: non-divisible canvas (partial tiles along both axes) ---------
    k_loc, k_len, k_wid, k_con, k_ori, key = jax.random.split(key, 6)
    canvas_odd = [520, 1040]
    location_o = jax.random.uniform(k_loc, (2,), jnp.float32, 128.0, 384.0)
    length_o = float(jax.random.uniform(k_len, (), jnp.float32, 100.0, 300.0))
    width_o = float(jax.random.uniform(k_wid, (), jnp.float32, 10.0, 40.0))
    contrast_o = float(jax.random.uniform(k_con, (), jnp.float32, 0.5, 1.0))
    orientation_o = float(jax.random.uniform(k_ori, (), jnp.float32, 0.0, math.pi))

    out_o = bar_forward(canvas_odd, location_o, length_o, width_o, contrast_o,
                        orientation_o, grey_level, pixel_boundaries)
    out_o = jax.block_until_ready(out_o)
    ref_o = bar_reference(canvas_odd, location_o, length_o, width_o, contrast_o,
                          orientation_o, grey_level, pixel_boundaries)
    assert out_o.shape == (1, 1, canvas_odd[0], canvas_odd[1])
    assert bool(jnp.allclose(out_o, ref_o, atol=1e-5)), "mismatch (520x1040 partial tiles)"

    # --- Case 4: batched stimuli, single pallas_call, scalar grey_level -------
    B = 5
    locs, lens_, wids, cons, oris = [], [], [], [], []
    for _ in range(B):
        k_loc, k_len, k_wid, k_con, k_ori, key = jax.random.split(key, 6)
        locs.append(jax.random.uniform(k_loc, (2,), jnp.float32, 4.0, 12.0))
        lens_.append(float(jax.random.uniform(k_len, (), jnp.float32, 6.0, 12.0)))
        wids.append(float(jax.random.uniform(k_wid, (), jnp.float32, 1.5, 4.0)))
        cons.append(float(jax.random.uniform(k_con, (), jnp.float32, 0.5, 1.0)))
        oris.append(float(jax.random.uniform(k_ori, (), jnp.float32, 0.0, math.pi)))

    out_batch = bar_forward_batched(canvas_small, locs, lens_, wids, cons, oris,
                                    grey_level, pixel_boundaries)
    out_batch = jax.block_until_ready(out_batch)
    assert out_batch.shape == (B, 1, canvas_small[0], canvas_small[1])
    for bi in range(B):
        ref_bi = bar_reference(canvas_small, locs[bi], lens_[bi], wids[bi],
                               cons[bi], oris[bi], grey_level, pixel_boundaries)
        assert bool(jnp.allclose(out_batch[bi:bi + 1], ref_bi, atol=1e-5)), \
            f"mismatch (batched, stimulus {bi})"

    print("KERNEL_OK")
</pallas_src>

<mosaic_0001>
module attributes {stable_mosaic.version = 11 : i64} {
  func.func @_bar_packed_kernel(%arg0: i32, %arg1: memref<8x8xf32, #tpu.memory_space<vmem>>, %arg2: memref<2x256xf32, #tpu.memory_space<vmem>>, %arg3: memref<8x256xf32, #tpu.memory_space<vmem>>) attributes {dimension_semantics = [#tpu.dimension_semantics<parallel>], iteration_bounds = array<i64: 1>, scalar_prefetch = 0 : i64, scratch_operands = 0 : i64, tpu.core_type = #tpu.core_type<tc>, window_params = [{transform_indices = @transform_0, window_bounds = array<i64: 8, 8>}, {pipeline_mode = #tpu.pipeline_mode<synchronous>, transform_indices = @transform_1, window_bounds = array<i64: 2, 256>}, {transform_indices = @transform_2, window_bounds = array<i64: 8, 256>}]} {
    %c0 = arith.constant 0 : index
    %c0_0 = arith.constant 0 : index
    %0 = vector.load %arg1[%c0, %c0_0] : memref<8x8xf32, #tpu.memory_space<vmem>>, vector<8x1xf32>
    %c0_1 = arith.constant 0 : index
    %c1 = arith.constant 1 : index
    %1 = vector.load %arg1[%c0_1, %c1] : memref<8x8xf32, #tpu.memory_space<vmem>>, vector<8x1xf32>
    %c0_2 = arith.constant 0 : index
    %c2 = arith.constant 2 : index
    %2 = vector.load %arg1[%c0_2, %c2] : memref<8x8xf32, #tpu.memory_space<vmem>>, vector<8x1xf32>
    %c0_3 = arith.constant 0 : index
    %c3 = arith.constant 3 : index
    %3 = vector.load %arg1[%c0_3, %c3] : memref<8x8xf32, #tpu.memory_space<vmem>>, vector<8x1xf32>
    %c0_4 = arith.constant 0 : index
    %c4 = arith.constant 4 : index
    %4 = vector.load %arg1[%c0_4, %c4] : memref<8x8xf32, #tpu.memory_space<vmem>>, vector<8x1xf32>
    %c0_5 = arith.constant 0 : index
    %c5 = arith.constant 5 : index
    %5 = vector.load %arg1[%c0_5, %c5] : memref<8x8xf32, #tpu.memory_space<vmem>>, vector<8x1xf32>
    %c0_6 = arith.constant 0 : index
    %c6 = arith.constant 6 : index
    %6 = vector.load %arg1[%c0_6, %c6] : memref<8x8xf32, #tpu.memory_space<vmem>>, vector<8x1xf32>
    %c0_7 = arith.constant 0 : index
    %c7 = arith.constant 7 : index
    %7 = vector.load %arg1[%c0_7, %c7] : memref<8x8xf32, #tpu.memory_space<vmem>>, vector<8x1xf32>
    %c0_8 = arith.constant 0 : index
    %c0_9 = arith.constant 0 : index
    %8 = vector.load %arg2[%c0_8, %c0_9] : memref<2x256xf32, #tpu.memory_space<vmem>>, vector<1x256xf32>
    %c1_10 = arith.constant 1 : index
    %c0_11 = arith.constant 0 : index
    %9 = vector.load %arg2[%c1_10, %c0_11] : memref<2x256xf32, #tpu.memory_space<vmem>>, vector<1x256xf32>
    %10 = arith.mulf %0, %4 : vector<8x1xf32>
    %11 = arith.mulf %1, %5 : vector<8x1xf32>
    %12 = arith.addf %10, %11 : vector<8x1xf32>
    %13 = arith.mulf %2, %4 : vector<8x1xf32>
    %14 = arith.mulf %3, %5 : vector<8x1xf32>
    %15 = arith.addf %13, %14 : vector<8x1xf32>
    %16 = vector.broadcast %0 : vector<8x1xf32> to vector<8x256xf32>
    %17 = vector.broadcast %8 : vector<1x256xf32> to vector<8x256xf32>
    %18 = arith.mulf %16, %17 : vector<8x256xf32>
    %19 = vector.broadcast %1 : vector<8x1xf32> to vector<8x256xf32>
    %20 = vector.broadcast %9 : vector<1x256xf32> to vector<8x256xf32>
    %21 = arith.mulf %19, %20 : vector<8x256xf32>
    %22 = arith.addf %18, %21 : vector<8x256xf32>
    %23 = vector.broadcast %12 : vector<8x1xf32> to vector<8x256xf32>
    %24 = arith.subf %22, %23 : vector<8x256xf32>
    %25 = vector.broadcast %2 : vector<8x1xf32> to vector<8x256xf32>
    %26 = vector.broadcast %8 : vector<1x256xf32> to vector<8x256xf32>
    %27 = arith.mulf %25, %26 : vector<8x256xf32>
    %28 = vector.broadcast %3 : vector<8x1xf32> to vector<8x256xf32>
    %29 = vector.broadcast %9 : vector<1x256xf32> to vector<8x256xf32>
    %30 = arith.mulf %28, %29 : vector<8x256xf32>
    %31 = arith.addf %27, %30 : vector<8x256xf32>
    %32 = vector.broadcast %15 : vector<8x1xf32> to vector<8x256xf32>
    %33 = arith.subf %31, %32 : vector<8x256xf32>
    %34 = math.absf %24 : vector<8x256xf32>
    %cst = arith.constant 1.000000e+00 : f32
    %35 = vector.broadcast %cst : f32 to vector<8x256xf32>
    %36 = arith.cmpf ole, %34, %35 : vector<8x256xf32>
    %37 = math.absf %33 : vector<8x256xf32>
    %cst_12 = arith.constant 1.000000e+00 : f32
    %38 = vector.broadcast %cst_12 : f32 to vector<8x256xf32>
    %39 = arith.cmpf ole, %37, %38 : vector<8x256xf32>
    %40 = arith.andi %36, %39 : vector<8x256xi1>
    %41 = vector.shape_cast %6 : vector<8x1xf32> to vector<8x1xf32>
    %42 = vector.broadcast %41 : vector<8x1xf32> to vector<8x256xf32>
    %43 = vector.shape_cast %7 : vector<8x1xf32> to vector<8x1xf32>
    %44 = vector.broadcast %43 : vector<8x1xf32> to vector<8x256xf32>
    %45 = arith.select %40, %42, %44 : vector<8x256xi1>, vector<8x256xf32>
    %c0_13 = arith.constant 0 : index
    %c0_14 = arith.constant 0 : index
    %46 = vector.load %arg3[%c0_13, %c0_14] : memref<8x256xf32, #tpu.memory_space<vmem>>, vector<8x256xf32>
    tpu.vector_store %arg3[%c0_13, %c0_14], %45 {strides = array<i32>} : memref<8x256xf32, #tpu.memory_space<vmem>>, vector<8x256xf32>,
    return
  }
  func.func @transform_0(%arg0: i32) -> (i32, i32) {
    %c0_i32 = arith.constant 0 : i32
    %c0_i32_0 = arith.constant 0 : i32
    return %arg0, %c0_i32 : i32, i32
  }
  func.func @transform_1(%arg0: i32) -> (i32, i32) {
    %c0_i32 = arith.constant 0 : i32
    %c0_i32_0 = arith.constant 0 : i32
    %c0_i32_1 = arith.constant 0 : i32
    return %c0_i32, %c0_i32_0 : i32, i32
  }
  func.func @transform_2(%arg0: i32) -> (i32, i32) {
    %c0_i32 = arith.constant 0 : i32
    %c0_i32_0 = arith.constant 0 : i32
    return %arg0, %c0_i32 : i32, i32
  }
}

</mosaic_0001>

<llo_original>
// kernel: tpu_custom_call.1
$region0: #{tpu_custom_call.1}
  #allocation0 [shape = 'u32[]', space=smem, size = 0x4, offset = 0x4, fixed_abs, tag = 'smem constant byte address 0x4 - core index']
  #allocation1 [shape = 'u32[144,128]{1,0:T(1,128)}', space=vmem, size = 0x12000, scoped, tag = 'internal scratch']
  %s0 = inlined_call_operand.hbm [shape: f32[8,8], index: 0, kind: input, shape index: {}]
  %s1 = inlined_call_operand.hbm [shape: f32[2,256], index: 1, kind: input, shape index: {}]
  %s2 = inlined_call_operand.hbm [shape: f32[8,256], index: 2, kind: output, shape index: {}]
  %s3 = sld [smem:[#allocation0]]
  $region26: #{tpu_custom_call.1} parent=0
    _
  %s5 = ssub.s32 1, %s3
  %s6 = scalar_select 0, %s5, %s3
  $region1: #{tpu_custom_call.1} parent=0
    #allocation2 [shape = 'u8[4096]{0}', space=vmem, size = 0x1000, scoped, tag = 'input window, operand 0, single buffered']
    #allocation3 [shape = 's32[1]{0}', space=sflag, size = 0x4, scoped, tag = 'scoped memory for tpu_custom_call.1']
    #allocation4 [shape = 's32[1]{0}', space=sflag, size = 0x4, scoped, tag = 'scoped memory for tpu_custom_call.1']
    #allocation5 [shape = 'u8[2048]{0}', space=vmem, size = 0x800, scoped, tag = 'input window, operand 1, single buffered']
    #allocation6 [shape = 's32[1]{0}', space=sflag, size = 0x4, scoped, tag = 'scoped memory for tpu_custom_call.1']
    #allocation7 [shape = 'u8[8192]{0}', space=vmem, size = 0x2000, scoped, tag = 'output window, operand 0, single buffered']
    %7 = vsyncpa [#allocation3], 0
    %8 = vsyncpa [#allocation6], 0
    %9 = vsyncpa [#allocation4], 0
    // Predicated region
    $region2: #{tpu_custom_call.1} parent=1 // pred_check
      _
    $region3: #{tpu_custom_call.1} parent=1 // pred_check_branch
      %11 = sbr.rel (0) target = $region5
    $region4: #{tpu_custom_call.1} parent=1 // pred_region
      %s13 = ssub.s32 128, 128
      %14 = vsyncadd [#allocation3], %s13
      %s16 = sshll.u32 [#allocation2], 4
      %s17 = int_to_ptr.vmem [resolvable:$true] %s16
      %19 = dma.hbm_to_vmem [thread:$0]  %s0, 128, %s17, [#allocation3]
    $region5: #{tpu_custom_call.1} parent=1 // pred_fallthru
      _
    // Predicated region
    $region6: #{tpu_custom_call.1} parent=1 // pred_check
      _
    $region7: #{tpu_custom_call.1} parent=1 // pred_check_branch
      %21 = sbr.rel (0) target = $region9
    $region8: #{tpu_custom_call.1} parent=1 // pred_region
      %s23 = ssub.s32 64, 64
      %24 = vsyncadd [#allocation6], %s23
      %s26 = sshll.u32 [#allocation5], 4
      %s27 = int_to_ptr.vmem [resolvable:$true] %s26
      %29 = dma.hbm_to_vmem [thread:$0]  %s1, 64, %s27, [#allocation6]
    $region9: #{tpu_custom_call.1} parent=1 // pred_fallthru
      _
    // Predicated region
    $region10: #{tpu_custom_call.1} parent=1 // pred_check
      _
    $region11: #{tpu_custom_call.1} parent=1 // pred_check_branch
      %31 = sbr.rel (0) target = $region13
    $region12: #{tpu_custom_call.1} parent=1 // pred_region
      %32 = dma.done [#allocation3], 128
    $region13: #{tpu_custom_call.1} parent=1 // pred_fallthru
      _
    // Predicated region
    $region14: #{tpu_custom_call.1} parent=1 // pred_check
      _
    $region15: #{tpu_custom_call.1} parent=1 // pred_check_branch
      %34 = sbr.rel (0) target = $region17
    $region16: #{tpu_custom_call.1} parent=1 // pred_region
      %35 = dma.done [#allocation6], 64
    $region17: #{tpu_custom_call.1} parent=1 // pred_fallthru
      _
    %v36 = vld [vmem:[#allocation2] sm:$0xff]
    %v37 = vld [vmem:[#allocation5] ss:$2 sm:$0x3]
    %s38 = scalar_lea.vmem [#allocation5], 1
    %v39 = vld [vmem:[%s38] ss:$2 sm:$0x3]
    %41 = vrot.lane.b32.xlu0 %v36, 124
    %v42 = vpop.permute.xlu0 %41
    %v44 = vmul.f32 %v36, %v42
    %46 = vrot.lane.b32.xlu0 %v44, 127
    %v47 = vpop.permute.xlu0 %46
    %v49 = vadd.f32 %v44, %v47
    %50 = vrot.lane.b32.xlu0 %v36, 126
    %v51 = vpop.permute.xlu0 %50
    %v53 = vmul.f32 %v36, %v51
    %55 = vrot.lane.b32.xlu0 %v53, 127
    %v56 = vpop.permute.xlu0 %55
    %v58 = vadd.f32 %v53, %v56
    %59 = vset.pattern.permute.xlu0 0
    %60 = vperm.xlu0 %59, %v36
    %v61 = vpop.permute.xlu0 %60
    %v64 = vlaneseq
    %v65 = vshrl.u32 %v64, 7
    %v66 = vsub.s32 0, %v65
    %v67 = vrot.slane %v37, %v66
    %v68 = vlaneseq
    %v69 = vshrl.u32 %v68, 7
    %v70 = vsub.s32 1, %v69
    %v71 = vrot.slane %v37, %v70
    %v74 = vmul.f32 %v61, %v67
    %v75 = vmul.f32 %v61, %v71
    %76 = vset.pattern.permute.xlu0 1
    %77 = vperm.xlu0 %76, %v36
    %v78 = vpop.permute.xlu0 %77
    %v81 = vlaneseq
    %v82 = vshrl.u32 %v81, 7
    %v83 = vsub.s32 0, %v82
    %v84 = vrot.slane %v39, %v83
    %v85 = vlaneseq
    %v86 = vshrl.u32 %v85, 7
    %v87 = vsub.s32 1, %v86
    %v88 = vrot.slane %v39, %v87
    %v91 = vmul.f32 %v78, %v84
    %v92 = vmul.f32 %v78, %v88
    %v93 = vadd.f32 %v74, %v91
    %v94 = vadd.f32 %v75, %v92
    %96 = vset.pattern.permute.xlu0 0
    %97 = vperm.xlu0 %96, %v49
    %v98 = vpop.permute.xlu0 %97
    %v100 = vsub.f32 %v93, %v98
    %v101 = vsub.f32 %v94, %v98
    %102 = vset.pattern.permute.xlu0 2
    %103 = vperm.xlu0 %102, %v36
    %v104 = vpop.permute.xlu0 %103
    %v106 = vmul.f32 %v104, %v67
    %v107 = vmul.f32 %v104, %v71
    %108 = vset.pattern.permute.xlu0 3
    %109 = vperm.xlu0 %108, %v36
    %v110 = vpop.permute.xlu0 %109
    %v112 = vmul.f32 %v110, %v84
    %v113 = vmul.f32 %v110, %v88
    %v114 = vadd.f32 %v106, %v112
    %v115 = vadd.f32 %v107, %v113
    %117 = vset.pattern.permute.xlu0 2
    %118 = vperm.xlu0 %117, %v58
    %v119 = vpop.permute.xlu0 %118
    %v121 = vsub.f32 %v114, %v119
    %v122 = vsub.f32 %v115, %v119
    %v123 = vand.u32 2147483647, %v100
    %v124 = vand.u32 2147483647, %v101
    %vm125 = vcmp.le.f32.partialorder %v123, 1.0
    %vm126 = vcmp.le.f32.partialorder %v124, 1.0
    %v127 = vand.u32 2147483647, %v121
    %v128 = vand.u32 2147483647, %v122
    %vm129 = vcmp.le.f32.partialorder %v127, 1.0
    %vm130 = vcmp.le.f32.partialorder %v128, 1.0
    %vm131 = vmand %vm125, %vm129
    %vm132 = vmand %vm126, %vm130
    %133 = vset.pattern.permute.xlu0 6
    %134 = vperm.xlu0 %133, %v36
    %v135 = vpop.permute.xlu0 %134
    %137 = vset.pattern.permute.xlu0 7
    %138 = vperm.xlu0 %137, %v36
    %v139 = vpop.permute.xlu0 %138
    %v141 = vsel %vm131, %v135, %v139
    %v142 = vsel %vm132, %v135, %v139
    %143 = vst [vmem:[#allocation7] sm:$0xff] %v141
    %144 = vst [vmem:[#allocation7 + $0x8] sm:$0xff] %v142
    // Predicated region
    $region18: #{tpu_custom_call.1} parent=1 // pred_check
      _
    $region19: #{tpu_custom_call.1} parent=1 // pred_check_branch
      %146 = sbr.rel (0) target = $region21
    $region20: #{tpu_custom_call.1} parent=1 // pred_region
      %s148 = ssub.s32 256, 256
      %149 = vsyncadd [#allocation4], %s148
      %s151 = sshll.u32 [#allocation7], 4
      %s152 = int_to_ptr.vmem [resolvable:$true] %s151
      %154 = dma.vmem_to_hbm [thread:$0]  %s152, 256, %s2, [#allocation4]
    $region21: #{tpu_custom_call.1} parent=1 // pred_fallthru
      _
    // Predicated region
    $region22: #{tpu_custom_call.1} parent=1 // pred_check
      _
    $region23: #{tpu_custom_call.1} parent=1 // pred_check_branch
      %156 = sbr.rel (0) target = $region25
    $region24: #{tpu_custom_call.1} parent=1 // pred_region
      %157 = dma.done [#allocation4], 256
    $region25: #{tpu_custom_call.1} parent=1 // pred_fallthru
      _
    %158 = vsyncpa [#allocation3], 1
    %159 = vsyncpa [#allocation6], 1
    %160 = vsyncpa [#allocation4], 1

</llo_original>
